<compile_context>
chip_gen: v5e
topology: v5e:2x2
jax: 0.10.0
libtpu: 0.0.40
codegen_flags: <defaults>
</compile_context>

<pallas_src>
import jax
import jax.numpy as jnp
from jax.experimental import pallas as pl
from jax.experimental.pallas import tpu as pltpu

LANES = 128


def _gmn_kernel(a_ref, apool_ref, xw1_ref, w2_ref, p_ref, out_ref):
    """Forward pass for one tile of Bt graph pairs (flattened block-diag form).

    a_ref    : [M, M]      bf16  block-diagonal normalized adjacency (M = Bt*2N)
    apool_ref: [2*Bt, M]   bf16  per-graph row-means of Â (graph1 rows, then graph2)
    xw1_ref  : [M, Hp]     bf16  node features with W1 pre-folded (lane-padded)
    w2_ref   : [Hp, Hp]    bf16  conv2 weight (zero-padded)
    p_ref    : [8, Hp]     f32   packed: row0=b1, row1=b2, row2=fc weight, row3=fc bias
    out_ref  : [Bt, Hp]    f32   similarity broadcast over lanes (column 0 is used)
    """
    b1 = p_ref[0:1, :]
    b2 = p_ref[1:2, :]
    wfc = p_ref[2:3, :]
    bfc = p_ref[3:4, :]

    bt = out_ref.shape[0]

    # conv1 (W1 folded in wrapper): h = relu(Â @ XW1 + b1)  -- one 256x256x128 matmul.
    h = jnp.dot(a_ref[...], xw1_ref[...],
                preferred_element_type=jnp.float32)                 # [M, Hp] f32
    h = jnp.maximum(h + b1, 0.0)

    # conv2 + mean-pool fused: g = A_pool @ (H @ W2) + b2.
    hw = jnp.dot(h.astype(jnp.bfloat16), w2_ref[...],
                 preferred_element_type=jnp.float32)                # [M, Hp] f32
    g = jnp.dot(apool_ref[...], hw.astype(jnp.bfloat16),
                preferred_element_type=jnp.float32) + b2            # [2Bt, Hp] f32

    # fc: |g1 - g2| . w_fc + b_fc as a VPU multiply + lane reduction.
    g1 = g[:bt, :]
    g2 = g[bt:, :]
    diff = jnp.abs(g1 - g2)
    sim = jnp.sum(diff * wfc, axis=-1, keepdims=True)               # [Bt, 1]
    out_ref[...] = sim + bfc                                        # lane-dense [Bt, Hp]


def graph_matching_network(a_pairs, x_pairs, w1, b1, w2, b2, wfc, bfc,
                           *, batch_tile=16, lanes=LANES):
    """Batched forward.

    a_pairs: [B, 2N, 2N] f32  per-pair block-diagonal normalized adjacency
    x_pairs: [B, 2N, C]  f32  concatenated node features of the two graphs
    Returns  [B, 1] f32 similarity scores.

    batch_tile=16 gives M = Bt*2N = 256 (fills the v6e/v7x MXU); use 8 on v5e.
    """
    b, two_n, _ = a_pairs.shape
    n = two_n // 2
    assert b % batch_tile == 0, "pad the batch of pairs to a multiple of batch_tile"
    g = b // batch_tile
    m = batch_tile * two_n
    c_in, hidden = w1.shape
    hp = lanes

    # ---- wrapper-side prep (plain XLA) ----
    # Fold W1 into X at true sizes: conv1 = Â @ (X W1) + b1.
    xw1 = jnp.einsum('bnc,ch->bnh', x_pairs, w1)                       # [B, 2N, H] f32
    xw1_p = jnp.zeros((b, two_n, hp), jnp.float32).at[:, :, :hidden].set(xw1)
    xw1_flat = xw1_p.reshape(g * m, hp).astype(jnp.bfloat16)           # [G*M, Hp]

    # Flattened block-diagonal Â per grid step.
    a_group = a_pairs.reshape(g, batch_tile, two_n, two_n)
    eye = jnp.eye(batch_tile, dtype=jnp.float32)
    a_flat = jnp.einsum('pq,gpij->gpiqj', eye, a_group)
    a_flat = a_flat.reshape(g * m, m).astype(jnp.bfloat16)             # [G*M, M]

    # Per-graph pooled adjacency rows (mean pool folded into the 2nd Â multiply).
    pool1 = jnp.mean(a_group[:, :, :n, :], axis=2)                     # [G, Bt, 2N]
    pool2 = jnp.mean(a_group[:, :, n:, :], axis=2)                     # [G, Bt, 2N]
    ap1 = jnp.einsum('pq,gpj->gpqj', eye, pool1).reshape(g, batch_tile, m)
    ap2 = jnp.einsum('pq,gpj->gpqj', eye, pool2).reshape(g, batch_tile, m)
    a_pool = jnp.concatenate([ap1, ap2], axis=1)                       # [G, 2Bt, M]
    a_pool = a_pool.reshape(g * 2 * batch_tile, m).astype(jnp.bfloat16)

    # Resident weights / packed small params.
    w2_p = jnp.zeros((hp, hp), jnp.float32).at[:hidden, :hidden].set(w2)
    w2_p = w2_p.astype(jnp.bfloat16)
    packed = jnp.zeros((8, hp), jnp.float32)
    packed = packed.at[0, :hidden].set(b1)
    packed = packed.at[1, :hidden].set(b2)
    packed = packed.at[2, :hidden].set(wfc)
    packed = packed.at[3, :].set(bfc)

    flops = g * (2 * m * m * hp                    # Â @ XW1
                 + 2 * m * hp * hp                 # H @ W2
                 + 2 * (2 * batch_tile) * m * hp)  # A_pool @ HW
    bytes_accessed = ((g * m * m) + (g * 2 * batch_tile * m) + (g * m * hp)
                      + hp * hp) * 2 + 8 * hp * 4 + b * hp * 4

    out = pl.pallas_call(
        _gmn_kernel,
        out_shape=jax.ShapeDtypeStruct((b, hp), jnp.float32),
        grid_spec=pltpu.PrefetchScalarGridSpec(
            num_scalar_prefetch=0,
            grid=(g,),
            in_specs=[
                pl.BlockSpec((m, m), lambda i: (i, 0)),
                pl.BlockSpec((2 * batch_tile, m), lambda i: (i, 0)),
                pl.BlockSpec((m, hp), lambda i: (i, 0)),
                pl.BlockSpec((hp, hp), lambda i: (0, 0)),
                pl.BlockSpec((8, hp), lambda i: (0, 0)),
            ],
            out_specs=pl.BlockSpec((batch_tile, hp), lambda i: (i, 0)),
        ),
        compiler_params=pltpu.CompilerParams(
            dimension_semantics=("parallel",)),
        cost_estimate=pl.CostEstimate(flops=flops, transcendentals=0,
                                      bytes_accessed=bytes_accessed),
    )(a_flat, a_pool, xw1_flat, w2_p, packed)
    return out[:, :1]                                                  # [B, 1]


# ----------------------------- plain-JAX glue --------------------------------

def normalized_adjacency(edge_index, num_nodes):
    """D^{-1/2}(A + I)D^{-1/2}. Duplicate edges are collapsed to a single edge
    (matches PyG gcn_norm on a coalesced edge_index)."""
    a = jnp.zeros((num_nodes, num_nodes), dtype=jnp.float32)
    a = a.at[edge_index[0], edge_index[1]].set(1.0)
    a = a + jnp.eye(num_nodes, dtype=jnp.float32)
    deg = jnp.sum(a, axis=1)
    d_inv_sqrt = 1.0 / jnp.sqrt(jnp.maximum(deg, 1e-12))
    return a * d_inv_sqrt[:, None] * d_inv_sqrt[None, :]


def init_params(key, in_channels, hidden_channels):
    k1, k2, k3, k4, k5, k6 = jax.random.split(key, 6)
    w1 = jax.random.normal(k1, (in_channels, hidden_channels), jnp.float32) * (
        1.0 / jnp.sqrt(jnp.float32(in_channels)))
    b1 = 0.1 * jax.random.normal(k2, (hidden_channels,), jnp.float32)
    w2 = jax.random.normal(k3, (hidden_channels, hidden_channels), jnp.float32) * (
        1.0 / jnp.sqrt(jnp.float32(hidden_channels)))
    b2 = 0.1 * jax.random.normal(k4, (hidden_channels,), jnp.float32)
    wfc = jax.random.normal(k5, (hidden_channels,), jnp.float32) * (
        1.0 / jnp.sqrt(jnp.float32(hidden_channels)))
    bfc = 0.1 * jax.random.normal(k6, (), jnp.float32)
    return w1, b1, w2, b2, wfc, bfc


if __name__ == "__main__":
    key = jax.random.PRNGKey(0)
    in_channels, hidden_channels = 4, 32
    n = 8                  # nodes per graph
    num_pairs = 256        # pairs per pallas_call -> grid of 16 steps
    batch_tile = 16        # pairs per grid step (M = 256; use 8 on v5e)

    kp, kx, ke1, ke2 = jax.random.split(key, 4)
    w1, b1, w2, b2, wfc, bfc = init_params(kp, in_channels, hidden_channels)

    # Node features for both graphs of every pair.
    x_all = jax.random.normal(kx, (num_pairs, 2, n, in_channels), jnp.float32)
    # Random edges (12 per graph).
    src = jax.random.randint(ke1, (num_pairs, 2, 12), 0, n)
    dst = jax.random.randint(ke2, (num_pairs, 2, 12), 0, n)
    edge_index = jnp.stack([src, dst], axis=2)                         # [B, 2, 2, E]

    # Normalized adjacencies for every graph, then per-pair block-diag + concat.
    adj = jax.vmap(jax.vmap(lambda e: normalized_adjacency(e, n)))(edge_index)
    a_pairs = jnp.zeros((num_pairs, 2 * n, 2 * n), jnp.float32)
    a_pairs = a_pairs.at[:, :n, :n].set(adj[:, 0]).at[:, n:, n:].set(adj[:, 1])
    x_pairs = x_all.reshape(num_pairs, 2 * n, in_channels)

    sim = graph_matching_network(a_pairs, x_pairs, w1, b1, w2, b2, wfc, bfc,
                                 batch_tile=batch_tile)
    sim = jax.block_until_ready(sim)                                   # [B, 1]

    # Pure-JAX reference applying the identical bf16-input / f32-accumulate recipe.
    # TODO(synk): this validates the bf16 recipe, not exact f32 PyTorch GCNConv
    # semantics (expect ~1e-3 divergence from the original f32 model).
    def ref_pair(a_pair, x_pair):
        f32, bf = jnp.float32, jnp.bfloat16
        a_ = a_pair.astype(bf).astype(f32)
        xw1_ = (x_pair @ w1).astype(bf).astype(f32)
        h = jnp.maximum(a_ @ xw1_ + b1, 0.0)
        hw = h.astype(bf).astype(f32) @ w2.astype(bf).astype(f32)
        hw_bf = hw.astype(bf).astype(f32)
        p1 = jnp.mean(a_pair[:n, :], axis=0).astype(bf).astype(f32)
        p2 = jnp.mean(a_pair[n:, :], axis=0).astype(bf).astype(f32)
        g1 = p1 @ hw_bf + b2
        g2 = p2 @ hw_bf + b2
        return jnp.sum(jnp.abs(g1 - g2) * wfc) + bfc

    ref = jax.vmap(ref_pair)(a_pairs, x_pairs)[:, None]                # [B, 1]
    assert sim.shape == (num_pairs, 1)
    assert jnp.allclose(sim, ref, atol=2e-3, rtol=2e-3), (sim[:4], ref[:4])

    print("KERNEL_OK")
</pallas_src>

<mosaic_0001>
module attributes {stable_mosaic.version = 11 : i64} {
  func.func @_gmn_kernel(%arg0: i32, %arg1: memref<256x256xbf16, #tpu.memory_space<vmem>>, %arg2: memref<32x256xbf16, #tpu.memory_space<vmem>>, %arg3: memref<256x128xbf16, #tpu.memory_space<vmem>>, %arg4: memref<128x128xbf16, #tpu.memory_space<vmem>>, %arg5: memref<8x128xf32, #tpu.memory_space<vmem>>, %arg6: memref<16x128xf32, #tpu.memory_space<vmem>>) attributes {dimension_semantics = [#tpu.dimension_semantics<parallel>], iteration_bounds = array<i64: 16>, scalar_prefetch = 0 : i64, scratch_operands = 0 : i64, tpu.core_type = #tpu.core_type<tc>, window_params = [{transform_indices = @transform_0, window_bounds = array<i64: 256, 256>}, {transform_indices = @transform_1, window_bounds = array<i64: 32, 256>}, {transform_indices = @transform_2, window_bounds = array<i64: 256, 128>}, {pipeline_mode = #tpu.pipeline_mode<synchronous>, transform_indices = @transform_3, window_bounds = array<i64: 128, 128>}, {pipeline_mode = #tpu.pipeline_mode<synchronous>, transform_indices = @transform_4, window_bounds = array<i64: 8, 128>}, {transform_indices = @transform_5, window_bounds = array<i64: 16, 128>}]} {
    %c0 = arith.constant 0 : index
    %c0_0 = arith.constant 0 : index
    %0 = vector.load %arg5[%c0, %c0_0] : memref<8x128xf32, #tpu.memory_space<vmem>>, vector<1x128xf32>
    %c1 = arith.constant 1 : index
    %c0_1 = arith.constant 0 : index
    %1 = vector.load %arg5[%c1, %c0_1] : memref<8x128xf32, #tpu.memory_space<vmem>>, vector<1x128xf32>
    %c2 = arith.constant 2 : index
    %c0_2 = arith.constant 0 : index
    %2 = vector.load %arg5[%c2, %c0_2] : memref<8x128xf32, #tpu.memory_space<vmem>>, vector<1x128xf32>
    %c3 = arith.constant 3 : index
    %c0_3 = arith.constant 0 : index
    %3 = vector.load %arg5[%c3, %c0_3] : memref<8x128xf32, #tpu.memory_space<vmem>>, vector<1x128xf32>
    %c0_4 = arith.constant 0 : index
    %c0_5 = arith.constant 0 : index
    %4 = vector.load %arg1[%c0_4, %c0_5] : memref<256x256xbf16, #tpu.memory_space<vmem>>, vector<256x256xbf16>
    %c0_6 = arith.constant 0 : index
    %c0_7 = arith.constant 0 : index
    %5 = vector.load %arg3[%c0_6, %c0_7] : memref<256x128xbf16, #tpu.memory_space<vmem>>, vector<256x128xbf16>
    %cst = arith.constant dense<0.000000e+00> : vector<256x128xf32>
    %6 = tpu.matmul %4, %5, %cst {dimension_numbers = #tpu.dot_dimension_numbers<[1], [0], [0], [1], [0, 0, 1, 1], [], []>} : vector<256x256xbf16>, vector<256x128xbf16>, vector<256x128xf32> -> vector<256x128xf32>
    %7 = vector.broadcast %0 : vector<1x128xf32> to vector<256x128xf32>
    %8 = arith.addf %6, %7 : vector<256x128xf32>
    %cst_8 = arith.constant 0.000000e+00 : f32
    %9 = vector.broadcast %cst_8 : f32 to vector<256x128xf32>
    %10 = arith.maximumf %8, %9 : vector<256x128xf32>
    %11 = arith.truncf %10 : vector<256x128xf32> to vector<256x128xbf16>
    %c0_9 = arith.constant 0 : index
    %c0_10 = arith.constant 0 : index
    %12 = vector.load %arg4[%c0_9, %c0_10] : memref<128x128xbf16, #tpu.memory_space<vmem>>, vector<128x128xbf16>
    %cst_11 = arith.constant dense<0.000000e+00> : vector<256x128xf32>
    %13 = tpu.matmul %11, %12, %cst_11 {dimension_numbers = #tpu.dot_dimension_numbers<[1], [0], [0], [1], [0, 0, 1, 1], [], []>} : vector<256x128xbf16>, vector<128x128xbf16>, vector<256x128xf32> -> vector<256x128xf32>
    %c0_12 = arith.constant 0 : index
    %c0_13 = arith.constant 0 : index
    %14 = vector.load %arg2[%c0_12, %c0_13] : memref<32x256xbf16, #tpu.memory_space<vmem>>, vector<32x256xbf16>
    %15 = arith.truncf %13 : vector<256x128xf32> to vector<256x128xbf16>
    %cst_14 = arith.constant dense<0.000000e+00> : vector<32x128xf32>
    %16 = tpu.matmul %14, %15, %cst_14 {dimension_numbers = #tpu.dot_dimension_numbers<[1], [0], [0], [1], [0, 0, 1, 1], [], []>} : vector<32x256xbf16>, vector<256x128xbf16>, vector<32x128xf32> -> vector<32x128xf32>
    %17 = vector.broadcast %1 : vector<1x128xf32> to vector<32x128xf32>
    %18 = arith.addf %16, %17 : vector<32x128xf32>
    %19 = vector.extract_strided_slice %18 {offsets = [0, 0], sizes = [16, 128], strides = [1, 1]} : vector<32x128xf32> to vector<16x128xf32>
    %20 = vector.extract_strided_slice %18 {offsets = [16, 0], sizes = [16, 128], strides = [1, 1]} : vector<32x128xf32> to vector<16x128xf32>
    %21 = arith.subf %19, %20 : vector<16x128xf32>
    %22 = math.absf %21 : vector<16x128xf32>
    %23 = vector.broadcast %2 : vector<1x128xf32> to vector<16x128xf32>
    %24 = arith.mulf %22, %23 : vector<16x128xf32>
    %cst_15 = arith.constant dense<0.000000e+00> : vector<16xf32>
    %25 = vector.multi_reduction <add>, %24, %cst_15 [1] : vector<16x128xf32> to vector<16xf32>
    %26 = vector.shape_cast %25 : vector<16xf32> to vector<16x1xf32>
    %27 = vector.broadcast %26 : vector<16x1xf32> to vector<16x128xf32>
    %28 = vector.broadcast %3 : vector<1x128xf32> to vector<16x128xf32>
    %29 = arith.addf %27, %28 : vector<16x128xf32>
    %c0_16 = arith.constant 0 : index
    %c0_17 = arith.constant 0 : index
    %30 = vector.load %arg6[%c0_16, %c0_17] : memref<16x128xf32, #tpu.memory_space<vmem>>, vector<16x128xf32>
    tpu.vector_store %arg6[%c0_16, %c0_17], %29 {strides = array<i32>} : memref<16x128xf32, #tpu.memory_space<vmem>>, vector<16x128xf32>,
    return
  }
  func.func @transform_0(%arg0: i32) -> (i32, i32) {
    %c0_i32 = arith.constant 0 : i32
    %c0_i32_0 = arith.constant 0 : i32
    return %arg0, %c0_i32 : i32, i32
  }
  func.func @transform_1(%arg0: i32) -> (i32, i32) {
    %c0_i32 = arith.constant 0 : i32
    %c0_i32_0 = arith.constant 0 : i32
    return %arg0, %c0_i32 : i32, i32
  }
  func.func @transform_2(%arg0: i32) -> (i32, i32) {
    %c0_i32 = arith.constant 0 : i32
    %c0_i32_0 = arith.constant 0 : i32
    return %arg0, %c0_i32 : i32, i32
  }
  func.func @transform_3(%arg0: i32) -> (i32, i32) {
    %c0_i32 = arith.constant 0 : i32
    %c0_i32_0 = arith.constant 0 : i32
    %c0_i32_1 = arith.constant 0 : i32
    return %c0_i32, %c0_i32_0 : i32, i32
  }
  func.func @transform_4(%arg0: i32) -> (i32, i32) {
    %c0_i32 = arith.constant 0 : i32
    %c0_i32_0 = arith.constant 0 : i32
    %c0_i32_1 = arith.constant 0 : i32
    return %c0_i32, %c0_i32_0 : i32, i32
  }
  func.func @transform_5(%arg0: i32) -> (i32, i32) {
    %c0_i32 = arith.constant 0 : i32
    %c0_i32_0 = arith.constant 0 : i32
    return %arg0, %c0_i32 : i32, i32
  }
}

</mosaic_0001>

<llo_original>
// kernel: tpu_custom_call.1
$region0: #{tpu_custom_call.1}
  #allocation0 [shape = 'u32[]', space=smem, size = 0x4, offset = 0x4, fixed_abs, tag = 'smem constant byte address 0x4 - core index']
  #allocation1 [shape = 'u32[72,128]{1,0:T(1,128)}', space=vmem, size = 0x9000, scoped, tag = 'internal scratch']
  %s0 = inlined_call_operand.hbm [shape: bf16[4096,256], index: 0, kind: input, shape index: {}]
  %s1 = inlined_call_operand.hbm [shape: bf16[512,256], index: 1, kind: input, shape index: {}]
  %s2 = inlined_call_operand.hbm [shape: bf16[4096,128], index: 2, kind: input, shape index: {}]
  %s3 = inlined_call_operand.hbm [shape: bf16[128,128], index: 3, kind: input, shape index: {}]
  %s4 = inlined_call_operand.hbm [shape: f32[8,128], index: 4, kind: input, shape index: {}]
  %s5 = inlined_call_operand.hbm [shape: f32[256,128], index: 5, kind: output, shape index: {}]
  %s6 = sld [smem:[#allocation0]]
  $region73: #{tpu_custom_call.1} parent=0
    _
  %s8 = ssub.s32 1, %s6
  %s9 = scalar_select 0, %s8, %s6
  $region1: #{tpu_custom_call.1} parent=0
    #allocation2 [shape = 'u8[262144]{0}', space=vmem, size = 0x40000, scoped, tag = 'input window, operand 0']
    #allocation3 [shape = 's32[2]{0}', space=sflag, size = 0x8, scoped, tag = 'scoped memory for tpu_custom_call.1']
    #allocation4 [shape = 's32[2]{0}', space=sflag, size = 0x8, scoped, tag = 'scoped memory for tpu_custom_call.1']
    #allocation5 [shape = 'u8[32768]{0}', space=vmem, size = 0x8000, scoped, tag = 'input window, operand 1']
    #allocation6 [shape = 's32[2]{0}', space=sflag, size = 0x8, scoped, tag = 'scoped memory for tpu_custom_call.1']
    #allocation7 [shape = 'u8[131072]{0}', space=vmem, size = 0x20000, scoped, tag = 'input window, operand 2']
    #allocation8 [shape = 'u8[32768]{0}', space=vmem, size = 0x8000, scoped, tag = 'input window, operand 3, single buffered']
    #allocation9 [shape = 's32[1]{0}', space=sflag, size = 0x4, scoped, tag = 'scoped memory for tpu_custom_call.1']
    #allocation10 [shape = 'u8[4096]{0}', space=vmem, size = 0x1000, scoped, tag = 'input window, operand 4, single buffered']
    #allocation11 [shape = 'u8[16384]{0}', space=vmem, size = 0x4000, scoped, tag = 'output window, operand 0']
    %10 = vsyncpa [#allocation3], 0
    %s11 = scalar_lea.sflag [#allocation3], 1
    %12 = vsyncpa %s11, 0
    %13 = vsyncpa [#allocation6], 0
    %s14 = scalar_lea.sflag [#allocation6], 1
    %15 = vsyncpa %s14, 0
    %16 = vsyncpa [#allocation9], 0
    %17 = vsyncpa [#allocation4], 0
    %s18 = scalar_lea.sflag [#allocation4], 1
    %19 = vsyncpa %s18, 0
    loop: start=0, step=1, limit=18
    $region2: #{tpu_custom_call.1} parent=1 // loop_pre_header
      _
    $region3: #{tpu_custom_call.1} parent=1 // loop_header
      %s21 = sphi 0, %s25
      %p22 = scmp.ge.s32.totalorder %s21, 18
      %s31 = sphi 0, %s33
      %s34 = sphi 0, %s31
      %s35 = sphi 0, %s34
      %s51 = sphi 0, %s35
      %s57 = sphi 0, %s59
      %s60 = sphi 0, %s57
      %s61 = sphi 0, %s60
      %s77 = sphi 0, %s61
      %s83 = sphi 0, %s85
      %s86 = sphi 0, %s83
      %s87 = sphi 0, %s86
      %s103 = sphi 0, %s87
      %s107 = sphi 0, %s107
      %s109 = sphi 0, %s107
      %s110 = sphi 0, %s109
      %s124 = sphi 0, %s110
      %s128 = sphi 0, %s128
      %s130 = sphi 0, %s128
      %s131 = sphi 0, %s130
      %s145 = sphi 0, %s131
      %s151 = sphi 0, %s153
      %s154 = sphi 0, %s151
      %s155 = sphi 0, %s154
      %s171 = sphi 0, %s155
    $region4: #{tpu_custom_call.1} parent=1 // loop_header_branch
      %24 = sbr.rel (%p22) target = $region8
    $region5: #{tpu_custom_call.1} parent=1 // loop_body
      %s26 = ssub.s32 %s21, 1
      %s27 = ssub.s32 %s21, 2
      %s28 = sadd.s32 %s21, 1
      %s29 = ssub.s32 %s21, %s28
      %p30 = scmp.eq.s32.totalorder %s29, 0
      %s32 = sadd.s32 %s31, 1
      %s33 = scalar_select %p30, %s31, %s32
      %p36 = pneg %p30
      %p37 = scmp.eq.s32.totalorder %s21, 15
      %p38 = por %p36, %p37
      %p39 = scmp.ne.s32.totalorder %s31, %s34
      %p40 = scmp.eq.s32.totalorder %s21, 0
      %p41 = por %p39, %p40
      %p42 = scmp.ne.s32.totalorder %s31, %s34
      %p43 = scmp.eq.s32.totalorder %s26, 15
      %p44 = por %p42, %p43
      %p45 = scmp.ne.s32.totalorder %s34, %s35
      %p46 = scmp.eq.s32.totalorder %s26, 0
      %p47 = por %p45, %p46
      %p48 = scmp.ne.s32.totalorder %s34, %s35
      %p49 = scmp.eq.s32.totalorder %s27, 15
      %p50 = por %p48, %p49
      %p52 = scmp.ne.s32.totalorder %s35, %s51
      %p53 = scmp.eq.s32.totalorder %s27, 0
      %p54 = por %p52, %p53
      %s55 = ssub.s32 %s21, %s28
      %p56 = scmp.eq.s32.totalorder %s55, 0
      %s58 = sadd.s32 %s57, 1
      %s59 = scalar_select %p56, %s57, %s58
      %p62 = pneg %p56
      %p63 = scmp.eq.s32.totalorder %s21, 15
      %p64 = por %p62, %p63
      %p65 = scmp.ne.s32.totalorder %s57, %s60
      %p66 = scmp.eq.s32.totalorder %s21, 0
      %p67 = por %p65, %p66
      %p68 = scmp.ne.s32.totalorder %s57, %s60
      %p69 = scmp.eq.s32.totalorder %s26, 15
      %p70 = por %p68, %p69
      %p71 = scmp.ne.s32.totalorder %s60, %s61
      %p72 = scmp.eq.s32.totalorder %s26, 0
      %p73 = por %p71, %p72
      %p74 = scmp.ne.s32.totalorder %s60, %s61
      %p75 = scmp.eq.s32.totalorder %s27, 15
      %p76 = por %p74, %p75
      %p78 = scmp.ne.s32.totalorder %s61, %s77
      %p79 = scmp.eq.s32.totalorder %s27, 0
      %p80 = por %p78, %p79
      %s81 = ssub.s32 %s21, %s28
      %p82 = scmp.eq.s32.totalorder %s81, 0
      %s84 = sadd.s32 %s83, 1
      %s85 = scalar_select %p82, %s83, %s84
      %p88 = pneg %p82
      %p89 = scmp.eq.s32.totalorder %s21, 15
      %p90 = por %p88, %p89
      %p91 = scmp.ne.s32.totalorder %s83, %s86
      %p92 = scmp.eq.s32.totalorder %s21, 0
      %p93 = por %p91, %p92
      %p94 = scmp.ne.s32.totalorder %s83, %s86
      %p95 = scmp.eq.s32.totalorder %s26, 15
      %p96 = por %p94, %p95
      %p97 = scmp.ne.s32.totalorder %s86, %s87
      %p98 = scmp.eq.s32.totalorder %s26, 0
      %p99 = por %p97, %p98
      %p100 = scmp.ne.s32.totalorder %s86, %s87
      %p101 = scmp.eq.s32.totalorder %s27, 15
      %p102 = por %p100, %p101
      %p104 = scmp.ne.s32.totalorder %s87, %s103
      %p105 = scmp.eq.s32.totalorder %s27, 0
      %p106 = por %p104, %p105
      %s108 = sadd.s32 %s107, 1
      %p111 = scmp.eq.s32.totalorder %s21, 15
      %p112 = scmp.ne.s32.totalorder %s107, %s109
      %p113 = scmp.eq.s32.totalorder %s21, 0
      %p114 = por %p112, %p113
      %p115 = scmp.ne.s32.totalorder %s107, %s109
      %p116 = scmp.eq.s32.totalorder %s26, 15
      %p117 = por %p115, %p116
      %p118 = scmp.ne.s32.totalorder %s109, %s110
      %p119 = scmp.eq.s32.totalorder %s26, 0
      %p120 = por %p118, %p119
      %p121 = scmp.ne.s32.totalorder %s109, %s110
      %p122 = scmp.eq.s32.totalorder %s27, 15
      %p123 = por %p121, %p122
      %p125 = scmp.ne.s32.totalorder %s110, %s124
      %p126 = scmp.eq.s32.totalorder %s27, 0
      %p127 = por %p125, %p126
      %s129 = sadd.s32 %s128, 1
      %p132 = scmp.eq.s32.totalorder %s21, 15
      %p133 = scmp.ne.s32.totalorder %s128, %s130
      %p134 = scmp.eq.s32.totalorder %s21, 0
      %p135 = por %p133, %p134
      %p136 = scmp.ne.s32.totalorder %s128, %s130
      %p137 = scmp.eq.s32.totalorder %s26, 15
      %p138 = por %p136, %p137
      %p139 = scmp.ne.s32.totalorder %s130, %s131
      %p140 = scmp.eq.s32.totalorder %s26, 0
      %p141 = por %p139, %p140
      %p142 = scmp.ne.s32.totalorder %s130, %s131
      %p143 = scmp.eq.s32.totalorder %s27, 15
      %p144 = por %p142, %p143
      %p146 = scmp.ne.s32.totalorder %s131, %s145
      %p147 = scmp.eq.s32.totalorder %s27, 0
      %p148 = por %p146, %p147
      %s149 = ssub.s32 %s21, %s28
      %p150 = scmp.eq.s32.totalorder %s149, 0
      %s152 = sadd.s32 %s151, 1
      %s153 = scalar_select %p150, %s151, %s152
      %p156 = pneg %p150
      %p157 = scmp.eq.s32.totalorder %s21, 15
      %p158 = por %p156, %p157
      %p159 = scmp.ne.s32.totalorder %s151, %s154
      %p160 = scmp.eq.s32.totalorder %s21, 0
      %p161 = por %p159, %p160
      %p162 = scmp.ne.s32.totalorder %s151, %s154
      %p163 = scmp.eq.s32.totalorder %s26, 15
      %p164 = por %p162, %p163
      %p165 = scmp.ne.s32.totalorder %s154, %s155
      %p166 = scmp.eq.s32.totalorder %s26, 0
      %p167 = por %p165, %p166
      %p168 = scmp.ne.s32.totalorder %s154, %s155
      %p169 = scmp.eq.s32.totalorder %s27, 15
      %p170 = por %p168, %p169
      %p172 = scmp.ne.s32.totalorder %s155, %s171
      %p173 = scmp.eq.s32.totalorder %s27, 0
      %p174 = por %p172, %p173
      %p175 = scmp.le.s32.totalorder 1, %s21
      %p176 = scmp.lt.s32.totalorder %s21, 17
      %p177 = pnand %p175, %p176
      %p178 = pneg %p177
      // Predicated region
      $region9: #{tpu_custom_call.1} parent=5 // pred_check
        _
      $region10: #{tpu_custom_call.1} parent=5 // pred_check_branch
        %180 = sbr.rel (%p177) target = $region12
      $region11: #{tpu_custom_call.1} parent=5 // pred_region
        %s181 = ssub.s32 %s21, 1
        // Predicated region
        $region13: #{tpu_custom_call.1} parent=11 // pred_check
          %p182 = pneg %p120
        $region14: #{tpu_custom_call.1} parent=11 // pred_check_branch
          %184 = sbr.rel (%p182) target = $region16
        $region15: #{tpu_custom_call.1} parent=11 // pred_region
          %186 = vsyncadd [#allocation9], 0
          %s187 = sshll.u32 %s3, 4
          %s188 = int_to_ptr.hbm [resolvable:$true] %s187
          %s189 = sshll.u32 [#allocation8], 4
          %s190 = int_to_ptr.vmem [resolvable:$true] %s189
          %195 = dma.hbm_to_vmem [thread:$0]  %s188, 1024, %s190, [#allocation9], 64, 64, 4
        $region16: #{tpu_custom_call.1} parent=11 // pred_fallthru
          _
        // Predicated region
        $region17: #{tpu_custom_call.1} parent=11 // pred_check
          %p196 = pneg %p141
        $region18: #{tpu_custom_call.1} parent=11 // pred_check_branch
          %198 = sbr.rel (%p196) target = $region20
        $region19: #{tpu_custom_call.1} parent=11 // pred_region
          %200 = vsyncadd [#allocation9], 0
          %s202 = sshll.u32 %s4, 4
          %s203 = int_to_ptr.hbm [resolvable:$true] %s202
          %s204 = sshll.u32 [#allocation10], 4
          %s205 = int_to_ptr.vmem [resolvable:$true] %s204
          %207 = dma.hbm_to_vmem [thread:$0]  %s203, 128, %s205, [#allocation9]
        $region20: #{tpu_custom_call.1} parent=11 // pred_fallthru
          _
      $region12: #{tpu_custom_call.1} parent=5 // pred_fallthru
        _
      %p208 = scmp.lt.s32.totalorder %s21, 16
      // Predicated region
      $region21: #{tpu_custom_call.1} parent=5 // pred_check
        %p209 = pneg %p208
      $region22: #{tpu_custom_call.1} parent=5 // pred_check_branch
        %211 = sbr.rel (%p209) target = $region24
      $region23: #{tpu_custom_call.1} parent=5 // pred_region
        // Predicated region
        $region25: #{tpu_custom_call.1} parent=23 // pred_check
          %p212 = pneg %p41
        $region26: #{tpu_custom_call.1} parent=23 // pred_check_branch
          %214 = sbr.rel (%p212) target = $region28
        $region27: #{tpu_custom_call.1} parent=23 // pred_region
          %s215 = sand.u32 %s31, 1
          %s216 = scalar_lea.sflag [#allocation3], %s215
          %s217 = sand.u32 %s31, 1
          %s218 = smul.addr %s217, 256
          %s219 = scalar_lea.vmem [#allocation2], %s218
          %s220 = smul.u32 32, %s21
          %222 = vsyncadd %s216, 0
          %s223 = smul.addr %s220, 2
          %s224 = smul.addr %s223, 4
          %s225 = scalar_lea.hbm %s0, %s224
          %s226 = sshll.u32 %s225, 4
          %s227 = int_to_ptr.hbm [resolvable:$true] %s226
          %s228 = sshll.u32 %s219, 4
          %s229 = int_to_ptr.vmem [resolvable:$true] %s228
          %234 = dma.hbm_to_vmem [thread:$0]  %s227, 4096, %s229, %s216, 128, 128, 8
        $region28: #{tpu_custom_call.1} parent=23 // pred_fallthru
          _
        // Predicated region
        $region29: #{tpu_custom_call.1} parent=23 // pred_check
          %p235 = pneg %p67
        $region30: #{tpu_custom_call.1} parent=23 // pred_check_branch
          %237 = sbr.rel (%p235) target = $region32
        $region31: #{tpu_custom_call.1} parent=23 // pred_region
          %s238 = sand.u32 %s21, 1
          %s239 = scalar_lea.sflag [#allocation6], %s238
          %s240 = sand.u32 %s57, 1
          %s241 = smul.addr %s240, 32
          %s242 = scalar_lea.vmem [#allocation5], %s241
          %s243 = smul.u32 4, %s21
          %245 = vsyncadd %s239, 0
          %s246 = smul.addr %s243, 2
          %s247 = smul.addr %s246, 4
          %s248 = scalar_lea.hbm %s1, %s247
          %s249 = sshll.u32 %s248, 4
          %s250 = int_to_ptr.hbm [resolvable:$true] %s249
          %s251 = sshll.u32 %s242, 4
          %s252 = int_to_ptr.vmem [resolvable:$true] %s251
          %257 = dma.hbm_to_vmem [thread:$0]  %s250, 512, %s252, %s239, 128, 128, 8
        $region32: #{tpu_custom_call.1} parent=23 // pred_fallthru
          _
        // Predicated region
        $region33: #{tpu_custom_call.1} parent=23 // pred_check
          %p258 = pneg %p93
        $region34: #{tpu_custom_call.1} parent=23 // pred_check_branch
          %260 = sbr.rel (%p258) target = $region36
        $region35: #{tpu_custom_call.1} parent=23 // pred_region
          %s261 = sand.u32 %s21, 1
          %s262 = scalar_lea.sflag [#allocation6], %s261
          %s263 = sand.u32 %s83, 1
          %s264 = smul.addr %s263, 128
          %s265 = scalar_lea.vmem [#allocation7], %s264
          %s266 = smul.u32 32, %s21
          %268 = vsyncadd %s262, 0
          %s269 = smul.addr %s266, 4
          %s270 = scalar_lea.hbm %s2, %s269
          %s271 = sshll.u32 %s270, 4
          %s272 = int_to_ptr.hbm [resolvable:$true] %s271
          %s273 = sshll.u32 %s265, 4
          %s274 = int_to_ptr.vmem [resolvable:$true] %s273
          %279 = dma.hbm_to_vmem [thread:$0]  %s272, 2048, %s274, %s262, 64, 64, 4
        $region36: #{tpu_custom_call.1} parent=23 // pred_fallthru
          _
      $region24: #{tpu_custom_call.1} parent=5 // pred_fallthru
        _
      %p280 = scmp.le.s32.totalorder 1, %s21
      %p281 = scmp.lt.s32.totalorder %s21, 17
      %p282 = pnand %p280, %p281
      %p283 = pneg %p282
      // Predicated region
      $region37: #{tpu_custom_call.1} parent=5 // pred_check
        _
      $region38: #{tpu_custom_call.1} parent=5 // pred_check_branch
        %285 = sbr.rel (%p282) target = $region40
      $region39: #{tpu_custom_call.1} parent=5 // pred_region
        %s286 = ssub.s32 %s21, 1
        %s287 = sand.u32 %s34, 1
        %s288 = scalar_lea.sflag [#allocation3], %s287
        %s289 = sand.u32 %s34, 1
        %s290 = smul.addr %s289, 256
        %s291 = scalar_lea.vmem [#allocation2], %s290
        // Predicated region
        $region41: #{tpu_custom_call.1} parent=39 // pred_check
          %p292 = pneg %p47
        $region42: #{tpu_custom_call.1} parent=39 // pred_check_branch
          %294 = sbr.rel (%p292) target = $region44
        $region43: #{tpu_custom_call.1} parent=39 // pred_region
          %296 = dma.done %s288, 4096
        $region44: #{tpu_custom_call.1} parent=39 // pred_fallthru
          _
        %s297 = sand.u32 %s26, 1
        %s298 = scalar_lea.sflag [#allocation6], %s297
        %s299 = sand.u32 %s60, 1
        %s300 = smul.addr %s299, 32
        %s301 = scalar_lea.vmem [#allocation5], %s300
        // Predicated region
        $region45: #{tpu_custom_call.1} parent=39 // pred_check
          %p302 = pneg %p73
        $region46: #{tpu_custom_call.1} parent=39 // pred_check_branch
          %304 = sbr.rel (%p302) target = $region48
        $region47: #{tpu_custom_call.1} parent=39 // pred_region
          %306 = dma.done %s298, 512
        $region48: #{tpu_custom_call.1} parent=39 // pred_fallthru
          _
        %s307 = sand.u32 %s26, 1
        %s308 = scalar_lea.sflag [#allocation6], %s307
        %s309 = sand.u32 %s86, 1
        %s310 = smul.addr %s309, 128
        %s311 = scalar_lea.vmem [#allocation7], %s310
        // Predicated region
        $region49: #{tpu_custom_call.1} parent=39 // pred_check
          %p312 = pneg %p99
        $region50: #{tpu_custom_call.1} parent=39 // pred_check_branch
          %314 = sbr.rel (%p312) target = $region52
        $region51: #{tpu_custom_call.1} parent=39 // pred_region
          %316 = dma.done %s308, 2048
        $region52: #{tpu_custom_call.1} parent=39 // pred_fallthru
          _
        // Predicated region
        $region53: #{tpu_custom_call.1} parent=39 // pred_check
          %p317 = pneg %p120
        $region54: #{tpu_custom_call.1} parent=39 // pred_check_branch
          %319 = sbr.rel (%p317) target = $region56
        $region55: #{tpu_custom_call.1} parent=39 // pred_region
          %321 = dma.done [#allocation9], 1024
        $region56: #{tpu_custom_call.1} parent=39 // pred_fallthru
          _
        // Predicated region
        $region57: #{tpu_custom_call.1} parent=39 // pred_check
          %p322 = pneg %p141
        $region58: #{tpu_custom_call.1} parent=39 // pred_check_branch
          %324 = sbr.rel (%p322) target = $region60
        $region59: #{tpu_custom_call.1} parent=39 // pred_region
          %326 = dma.done [#allocation9], 128
        $region60: #{tpu_custom_call.1} parent=39 // pred_fallthru
          _
        %s327 = sand.u32 %s34, 1
        %s328 = scalar_lea.sflag [#allocation3], %s327
        %s329 = sand.u32 %s34, 1
        %s330 = smul.addr %s329, 256
        %s331 = scalar_lea.vmem [#allocation2], %s330
        %p332 = pneg %p47
        %p333 = pneg %p44
        %s334 = sand.u32 %s26, 1
        %s335 = scalar_lea.sflag [#allocation6], %s334
        %s336 = sand.u32 %s60, 1
        %s337 = smul.addr %s336, 32
        %s338 = scalar_lea.vmem [#allocation5], %s337
        %p339 = pneg %p73
        %p340 = pneg %p70
        %s341 = sand.u32 %s26, 1
        %s342 = scalar_lea.sflag [#allocation6], %s341
        %s343 = sand.u32 %s86, 1
        %s344 = smul.addr %s343, 128
        %s345 = scalar_lea.vmem [#allocation7], %s344
        %p346 = pneg %p99
        %p347 = pneg %p96
        %p348 = pneg %p120
        %p349 = pneg %p117
        %p350 = pneg %p141
        %p351 = pneg %p138
        %p352 = pneg %p167
        %p353 = pneg %p164
        %s354 = sand.u32 %s154, 1
        %s355 = scalar_lea.sflag [#allocation4], %s354
        %s356 = sand.u32 %s154, 1
        %s357 = smul.addr %s356, 16
        %s358 = scalar_lea.vmem [#allocation11], %s357
        %s359 = smul.u32 32, %s26
        %s360 = smul.u32 4, %s26
        %s361 = smul.u32 32, %s26
        %s362 = smul.u32 2, %s26
        %v363 = vld [vmem:[#allocation10] sm:$0x1]
        %v364 = vld [vmem:[#allocation10 + $0x1] sm:$0x1]
        %v365 = vld [vmem:[#allocation10 + $0x2] sm:$0x1]
        %v366 = vld [vmem:[#allocation10 + $0x3] sm:$0x1]
        %v367 = vld [vmem:[%s291] sm:$0xff]
        %v368 = vld [vmem:[%s291 + $0x8] sm:$0xff]
        %v369 = vld [vmem:[%s291 + $0x10] sm:$0xff]
        %v370 = vld [vmem:[%s291 + $0x18] sm:$0xff]
        %v371 = vld [vmem:[%s291 + $0x20] sm:$0xff]
        %v372 = vld [vmem:[%s291 + $0x28] sm:$0xff]
        %v373 = vld [vmem:[%s291 + $0x30] sm:$0xff]
        %v374 = vld [vmem:[%s291 + $0x38] sm:$0xff]
        %v375 = vld [vmem:[%s291 + $0x40] sm:$0xff]
        %v376 = vld [vmem:[%s291 + $0x48] sm:$0xff]
        %v377 = vld [vmem:[%s291 + $0x50] sm:$0xff]
        %v378 = vld [vmem:[%s291 + $0x58] sm:$0xff]
        %v379 = vld [vmem:[%s291 + $0x60] sm:$0xff]
        %v380 = vld [vmem:[%s291 + $0x68] sm:$0xff]
        %v381 = vld [vmem:[%s291 + $0x70] sm:$0xff]
        %v382 = vld [vmem:[%s291 + $0x78] sm:$0xff]
        %v383 = vld [vmem:[%s291 + $0x80] sm:$0xff]
        %v384 = vld [vmem:[%s291 + $0x88] sm:$0xff]
        %v385 = vld [vmem:[%s291 + $0x90] sm:$0xff]
        %v386 = vld [vmem:[%s291 + $0x98] sm:$0xff]
        %v387 = vld [vmem:[%s291 + $0xa0] sm:$0xff]
        %v388 = vld [vmem:[%s291 + $0xa8] sm:$0xff]
        %v389 = vld [vmem:[%s291 + $0xb0] sm:$0xff]
        %v390 = vld [vmem:[%s291 + $0xb8] sm:$0xff]
        %v391 = vld [vmem:[%s291 + $0xc0] sm:$0xff]
        %v392 = vld [vmem:[%s291 + $0xc8] sm:$0xff]
        %v393 = vld [vmem:[%s291 + $0xd0] sm:$0xff]
        %v394 = vld [vmem:[%s291 + $0xd8] sm:$0xff]
        %v395 = vld [vmem:[%s291 + $0xe0] sm:$0xff]
        %v396 = vld [vmem:[%s291 + $0xe8] sm:$0xff]
        %v397 = vld [vmem:[%s291 + $0xf0] sm:$0xff]
        %v398 = vld [vmem:[%s291 + $0xf8] sm:$0xff]
        %v399 = vld [vmem:[%s311] sm:$0xf]
        %v400 = vld [vmem:[%s311 + $0x4] sm:$0xf]
        %v401 = vld [vmem:[%s311 + $0x8] sm:$0xf]
        %v402 = vld [vmem:[%s311 + $0xc] sm:$0xf]
        %v403 = vld [vmem:[%s311 + $0x10] sm:$0xf]
        %v404 = vld [vmem:[%s311 + $0x14] sm:$0xf]
        %v405 = vld [vmem:[%s311 + $0x18] sm:$0xf]
        %v406 = vld [vmem:[%s311 + $0x1c] sm:$0xf]
        %v407 = vld [vmem:[%s311 + $0x20] sm:$0xf]
        %v408 = vld [vmem:[%s311 + $0x24] sm:$0xf]
        %v409 = vld [vmem:[%s311 + $0x28] sm:$0xf]
        %v410 = vld [vmem:[%s311 + $0x2c] sm:$0xf]
        %v411 = vld [vmem:[%s311 + $0x30] sm:$0xf]
        %v412 = vld [vmem:[%s311 + $0x34] sm:$0xf]
        %v413 = vld [vmem:[%s311 + $0x38] sm:$0xf]
        %v414 = vld [vmem:[%s311 + $0x3c] sm:$0xf]
        %v415 = vld [vmem:[%s311 + $0x40] sm:$0xf]
        %v416 = vld [vmem:[%s311 + $0x44] sm:$0xf]
        %v417 = vld [vmem:[%s311 + $0x48] sm:$0xf]
        %v418 = vld [vmem:[%s311 + $0x4c] sm:$0xf]
        %v419 = vld [vmem:[%s311 + $0x50] sm:$0xf]
        %v420 = vld [vmem:[%s311 + $0x54] sm:$0xf]
        %v421 = vld [vmem:[%s311 + $0x58] sm:$0xf]
        %v422 = vld [vmem:[%s311 + $0x5c] sm:$0xf]
        %v423 = vld [vmem:[%s311 + $0x60] sm:$0xf]
        %v424 = vld [vmem:[%s311 + $0x64] sm:$0xf]
        %v425 = vld [vmem:[%s311 + $0x68] sm:$0xf]
        %v426 = vld [vmem:[%s311 + $0x6c] sm:$0xf]
        %v427 = vld [vmem:[%s311 + $0x70] sm:$0xf]
        %v428 = vld [vmem:[%s311 + $0x74] sm:$0xf]
        %v429 = vld [vmem:[%s311 + $0x78] sm:$0xf]
        %v430 = vld [vmem:[%s311 + $0x7c] sm:$0xf]
        %v431 = vperm.slane %v363, 0
        %v464 = vunpack.c.l.b16 %v367
        %v465 = vunpack.c.h.b16 %v367
        %v466 = vunpack.c.l.b16 %v368
        %v467 = vunpack.c.h.b16 %v368
        %v468 = vunpack.c.l.b16 %v369
        %v469 = vunpack.c.h.b16 %v369
        %v470 = vunpack.c.l.b16 %v370
        %v471 = vunpack.c.h.b16 %v370
        %v472 = vunpack.c.l.b16 %v371
        %v473 = vunpack.c.h.b16 %v371
        %v474 = vunpack.c.l.b16 %v372
        %v475 = vunpack.c.h.b16 %v372
        %v476 = vunpack.c.l.b16 %v373
        %v477 = vunpack.c.h.b16 %v373
        %v478 = vunpack.c.l.b16 %v374
        %v479 = vunpack.c.h.b16 %v374
        %v480 = vunpack.c.l.b16 %v375
        %v481 = vunpack.c.h.b16 %v375
        %v482 = vunpack.c.l.b16 %v376
        %v483 = vunpack.c.h.b16 %v376
        %v484 = vunpack.c.l.b16 %v377
        %v485 = vunpack.c.h.b16 %v377
        %v486 = vunpack.c.l.b16 %v378
        %v487 = vunpack.c.h.b16 %v378
        %v488 = vunpack.c.l.b16 %v379
        %v489 = vunpack.c.h.b16 %v379
        %v490 = vunpack.c.l.b16 %v380
        %v491 = vunpack.c.h.b16 %v380
        %v492 = vunpack.c.l.b16 %v381
        %v493 = vunpack.c.h.b16 %v381
        %v494 = vunpack.c.l.b16 %v382
        %v495 = vunpack.c.h.b16 %v382
        %v496 = vunpack.c.l.b16 %v383
        %v497 = vunpack.c.h.b16 %v383
        %v498 = vunpack.c.l.b16 %v384
        %v499 = vunpack.c.h.b16 %v384
        %v500 = vunpack.c.l.b16 %v385
        %v501 = vunpack.c.h.b16 %v385
        %v502 = vunpack.c.l.b16 %v386
        %v503 = vunpack.c.h.b16 %v386
        %v504 = vunpack.c.l.b16 %v387
        %v505 = vunpack.c.h.b16 %v387
        %v506 = vunpack.c.l.b16 %v388
        %v507 = vunpack.c.h.b16 %v388
        %v508 = vunpack.c.l.b16 %v389
        %v509 = vunpack.c.h.b16 %v389
        %v510 = vunpack.c.l.b16 %v390
        %v511 = vunpack.c.h.b16 %v390
        %v512 = vunpack.c.l.b16 %v391
        %v513 = vunpack.c.h.b16 %v391
        %v514 = vunpack.c.l.b16 %v392
        %v515 = vunpack.c.h.b16 %v392
        %v516 = vunpack.c.l.b16 %v393
        %v517 = vunpack.c.h.b16 %v393
        %v518 = vunpack.c.l.b16 %v394
        %v519 = vunpack.c.h.b16 %v394
        %v520 = vunpack.c.l.b16 %v395
        %v521 = vunpack.c.h.b16 %v395
        %v522 = vunpack.c.l.b16 %v396
        %v523 = vunpack.c.h.b16 %v396
        %v524 = vunpack.c.l.b16 %v397
        %v525 = vunpack.c.h.b16 %v397
        %v526 = vunpack.c.l.b16 %v398
        %v527 = vunpack.c.h.b16 %v398
        %v528 = vpack.c.b16 %v466, %v464
        %v529 = vpack.c.b16 %v467, %v465
        %v530 = vpack.c.b16 %v470, %v468
        %v531 = vpack.c.b16 %v471, %v469
        %v532 = vpack.c.b16 %v474, %v472
        %v533 = vpack.c.b16 %v475, %v473
        %v534 = vpack.c.b16 %v478, %v476
        %v535 = vpack.c.b16 %v479, %v477
        %v536 = vpack.c.b16 %v482, %v480
        %v537 = vpack.c.b16 %v483, %v481
        %v538 = vpack.c.b16 %v486, %v484
        %v539 = vpack.c.b16 %v487, %v485
        %v540 = vpack.c.b16 %v490, %v488
        %v541 = vpack.c.b16 %v491, %v489
        %v542 = vpack.c.b16 %v494, %v492
        %v543 = vpack.c.b16 %v495, %v493
        %v544 = vpack.c.b16 %v498, %v496
        %v545 = vpack.c.b16 %v499, %v497
        %v546 = vpack.c.b16 %v502, %v500
        %v547 = vpack.c.b16 %v503, %v501
        %v548 = vpack.c.b16 %v506, %v504
        %v549 = vpack.c.b16 %v507, %v505
        %v550 = vpack.c.b16 %v510, %v508
        %v551 = vpack.c.b16 %v511, %v509
        %v552 = vpack.c.b16 %v514, %v512
        %v553 = vpack.c.b16 %v515, %v513
        %v554 = vpack.c.b16 %v518, %v516
        %v555 = vpack.c.b16 %v519, %v517
        %v556 = vpack.c.b16 %v522, %v520
        %v557 = vpack.c.b16 %v523, %v521
        %v558 = vpack.c.b16 %v526, %v524
        %v559 = vpack.c.b16 %v527, %v525
        %v624 = vunpack.c.l.b16 %v399
        %v625 = vunpack.c.l.b16 %v400
        %v626 = vunpack.c.l.b16 %v401
        %v627 = vunpack.c.l.b16 %v402
        %v628 = vunpack.c.l.b16 %v403
        %v629 = vunpack.c.l.b16 %v404
        %v630 = vunpack.c.l.b16 %v405
        %v631 = vunpack.c.l.b16 %v406
        %v632 = vunpack.c.l.b16 %v407
        %v633 = vunpack.c.l.b16 %v408
        %v634 = vunpack.c.l.b16 %v409
        %v635 = vunpack.c.l.b16 %v410
        %v636 = vunpack.c.l.b16 %v411
        %v637 = vunpack.c.l.b16 %v412
        %v638 = vunpack.c.l.b16 %v413
        %v639 = vunpack.c.l.b16 %v414
        %v640 = vunpack.c.l.b16 %v415
        %v641 = vunpack.c.l.b16 %v416
        %v642 = vunpack.c.l.b16 %v417
        %v643 = vunpack.c.l.b16 %v418
        %v644 = vunpack.c.l.b16 %v419
        %v645 = vunpack.c.l.b16 %v420
        %v646 = vunpack.c.l.b16 %v421
        %v647 = vunpack.c.l.b16 %v422
        %v648 = vunpack.c.l.b16 %v423
        %v649 = vunpack.c.l.b16 %v424
        %v650 = vunpack.c.l.b16 %v425
        %v651 = vunpack.c.l.b16 %v426
        %v652 = vunpack.c.l.b16 %v427
        %v653 = vunpack.c.l.b16 %v428
        %v654 = vunpack.c.l.b16 %v429
        %v655 = vunpack.c.l.b16 %v430
        %v656 = vpack.c.b16 %v625, %v624
        %v657 = vpack.c.b16 %v627, %v626
        %v658 = vpack.c.b16 %v629, %v628
        %v659 = vpack.c.b16 %v631, %v630
        %v660 = vpack.c.b16 %v633, %v632
        %v661 = vpack.c.b16 %v635, %v634
        %v662 = vpack.c.b16 %v637, %v636
        %v663 = vpack.c.b16 %v639, %v638
        %v664 = vpack.c.b16 %v641, %v640
        %v665 = vpack.c.b16 %v643, %v642
        %v666 = vpack.c.b16 %v645, %v644
        %v667 = vpack.c.b16 %v647, %v646
        %v668 = vpack.c.b16 %v649, %v648
        %v669 = vpack.c.b16 %v651, %v650
        %v670 = vpack.c.b16 %v653, %v652
        %v671 = vpack.c.b16 %v655, %v654
        %688 = vmatpush.bf16.msra.mxu0 %v663
        %689 = vmatpush.bf16.msra.mxu0 %v662
        %690 = vmatpush.bf16.msra.mxu0 %v661
        %691 = vmatpush.bf16.msra.mxu0 %v660
        %692 = vmatpush.bf16.msra.mxu0 %v659
        %693 = vmatpush.bf16.msra.mxu0 %v658
        %694 = vmatpush.bf16.msra.mxu0 %v657
        %695 = vmatpush.bf16.msra.mxu0 %v656
        %696 = vmatmul.bf16.gmra.mxu0 %v528
        %v697 = vpop.f32.mrf.mxu0
        %v698 = vadd.f32 %v431, %v697
        %v699 = vpop.f32.mrf.mxu0
        %v700 = vadd.f32 %v431, %v699
        %701 = vmatmul.bf16.gmra.mxu0 %v530
        %v702 = vpop.f32.mrf.mxu0
        %v703 = vadd.f32 %v431, %v702
        %v704 = vpop.f32.mrf.mxu0
        %v705 = vadd.f32 %v431, %v704
        %706 = vmatmul.bf16.gmra.mxu0 %v532
        %v707 = vpop.f32.mrf.mxu0
        %v708 = vadd.f32 %v431, %v707
        %v709 = vpop.f32.mrf.mxu0
        %v710 = vadd.f32 %v431, %v709
        %711 = vmatmul.bf16.gmra.mxu0 %v534
        %v712 = vpop.f32.mrf.mxu0
        %v713 = vadd.f32 %v431, %v712
        %v714 = vpop.f32.mrf.mxu0
        %v715 = vadd.f32 %v431, %v714
        %716 = vmatmul.bf16.gmra.mxu0 %v536
        %v717 = vpop.f32.mrf.mxu0
        %v718 = vadd.f32 %v431, %v717
        %v719 = vpop.f32.mrf.mxu0
        %v720 = vadd.f32 %v431, %v719
        %721 = vmatmul.bf16.gmra.mxu0 %v538
        %v722 = vpop.f32.mrf.mxu0
        %v723 = vadd.f32 %v431, %v722
        %v724 = vpop.f32.mrf.mxu0
        %v725 = vadd.f32 %v431, %v724
        %726 = vmatmul.bf16.gmra.mxu0 %v540
        %v727 = vpop.f32.mrf.mxu0
        %v728 = vadd.f32 %v431, %v727
        %v729 = vpop.f32.mrf.mxu0
        %v730 = vadd.f32 %v431, %v729
        %731 = vmatmul.bf16.gmra.mxu0 %v542
        %v732 = vpop.f32.mrf.mxu0
        %v733 = vadd.f32 %v431, %v732
        %v734 = vpop.f32.mrf.mxu0
        %v735 = vadd.f32 %v431, %v734
        %736 = vmatmul.bf16.gmra.mxu0 %v544
        %v737 = vpop.f32.mrf.mxu0
        %v738 = vadd.f32 %v431, %v737
        %v739 = vpop.f32.mrf.mxu0
        %v740 = vadd.f32 %v431, %v739
        %741 = vmatmul.bf16.gmra.mxu0 %v546
        %v742 = vpop.f32.mrf.mxu0
        %v743 = vadd.f32 %v431, %v742
        %v744 = vpop.f32.mrf.mxu0
        %v745 = vadd.f32 %v431, %v744
        %746 = vmatmul.bf16.gmra.mxu0 %v548
        %v747 = vpop.f32.mrf.mxu0
        %v748 = vadd.f32 %v431, %v747
        %v749 = vpop.f32.mrf.mxu0
        %v750 = vadd.f32 %v431, %v749
        %751 = vmatmul.bf16.gmra.mxu0 %v550
        %v752 = vpop.f32.mrf.mxu0
        %v753 = vadd.f32 %v431, %v752
        %v754 = vpop.f32.mrf.mxu0
        %v755 = vadd.f32 %v431, %v754
        %756 = vmatmul.bf16.gmra.mxu0 %v552
        %v757 = vpop.f32.mrf.mxu0
        %v758 = vadd.f32 %v431, %v757
        %v759 = vpop.f32.mrf.mxu0
        %v760 = vadd.f32 %v431, %v759
        %761 = vmatmul.bf16.gmra.mxu0 %v554
        %v762 = vpop.f32.mrf.mxu0
        %v763 = vadd.f32 %v431, %v762
        %v764 = vpop.f32.mrf.mxu0
        %v765 = vadd.f32 %v431, %v764
        %766 = vmatmul.bf16.gmra.mxu0 %v556
        %v767 = vpop.f32.mrf.mxu0
        %v768 = vadd.f32 %v431, %v767
        %v769 = vpop.f32.mrf.mxu0
        %v770 = vadd.f32 %v431, %v769
        %771 = vmatmul.bf16.gmra.mxu0 %v558
        %v772 = vpop.f32.mrf.mxu0
        %v773 = vadd.f32 %v431, %v772
        %v774 = vpop.f32.mrf.mxu0
        %v775 = vadd.f32 %v431, %v774
        %776 = vdwg.mxu0
        %777 = vmatpush.bf16.msra.mxu0 %v671
        %778 = vmatpush.bf16.msra.mxu0 %v670
        %779 = vmatpush.bf16.msra.mxu0 %v669
        %780 = vmatpush.bf16.msra.mxu0 %v668
        %781 = vmatpush.bf16.msra.mxu0 %v667
        %782 = vmatpush.bf16.msra.mxu0 %v666
        %783 = vmatpush.bf16.msra.mxu0 %v665
        %784 = vmatpush.bf16.msra.mxu0 %v664
        %785 = vmatmul.bf16.gmra.mxu0 %v529
        %v786 = vpop.f32.mrf.mxu0
        %v787 = vadd.f32 %v698, %v786
        %v788 = vpop.f32.mrf.mxu0
        %v789 = vadd.f32 %v700, %v788
        %790 = vmatmul.bf16.gmra.mxu0 %v531
        %v791 = vpop.f32.mrf.mxu0
        %v792 = vadd.f32 %v703, %v791
        %v793 = vpop.f32.mrf.mxu0
        %v794 = vadd.f32 %v705, %v793
        %795 = vmatmul.bf16.gmra.mxu0 %v533
        %v796 = vpop.f32.mrf.mxu0
        %v797 = vadd.f32 %v708, %v796
        %v798 = vpop.f32.mrf.mxu0
        %v799 = vadd.f32 %v710, %v798
        %800 = vmatmul.bf16.gmra.mxu0 %v535
        %v801 = vpop.f32.mrf.mxu0
        %v802 = vadd.f32 %v713, %v801
        %v803 = vpop.f32.mrf.mxu0
        %v804 = vadd.f32 %v715, %v803
        %805 = vmatmul.bf16.gmra.mxu0 %v537
        %v806 = vpop.f32.mrf.mxu0
        %v807 = vadd.f32 %v718, %v806
        %v808 = vpop.f32.mrf.mxu0
        %v809 = vadd.f32 %v720, %v808
        %810 = vmatmul.bf16.gmra.mxu0 %v539
        %v811 = vpop.f32.mrf.mxu0
        %v812 = vadd.f32 %v723, %v811
        %v813 = vpop.f32.mrf.mxu0
        %v814 = vadd.f32 %v725, %v813
        %815 = vmatmul.bf16.gmra.mxu0 %v541
        %v816 = vpop.f32.mrf.mxu0
        %v817 = vadd.f32 %v728, %v816
        %v818 = vpop.f32.mrf.mxu0
        %v819 = vadd.f32 %v730, %v818
        %820 = vmatmul.bf16.gmra.mxu0 %v543
        %v821 = vpop.f32.mrf.mxu0
        %v822 = vadd.f32 %v733, %v821
        %v823 = vpop.f32.mrf.mxu0
        %v824 = vadd.f32 %v735, %v823
        %825 = vmatmul.bf16.gmra.mxu0 %v545
        %v826 = vpop.f32.mrf.mxu0
        %v827 = vadd.f32 %v738, %v826
        %v828 = vpop.f32.mrf.mxu0
        %v829 = vadd.f32 %v740, %v828
        %830 = vmatmul.bf16.gmra.mxu0 %v547
        %v831 = vpop.f32.mrf.mxu0
        %v832 = vadd.f32 %v743, %v831
        %v833 = vpop.f32.mrf.mxu0
        %v834 = vadd.f32 %v745, %v833
        %835 = vmatmul.bf16.gmra.mxu0 %v549
        %v836 = vpop.f32.mrf.mxu0
        %v837 = vadd.f32 %v748, %v836
        %v838 = vpop.f32.mrf.mxu0
        %v839 = vadd.f32 %v750, %v838
        %840 = vmatmul.bf16.gmra.mxu0 %v551
        %v841 = vpop.f32.mrf.mxu0
        %v842 = vadd.f32 %v753, %v841
        %v843 = vpop.f32.mrf.mxu0
        %v844 = vadd.f32 %v755, %v843
        %845 = vmatmul.bf16.gmra.mxu0 %v553
        %v846 = vpop.f32.mrf.mxu0
        %v847 = vadd.f32 %v758, %v846
        %v848 = vpop.f32.mrf.mxu0
        %v849 = vadd.f32 %v760, %v848
        %850 = vmatmul.bf16.gmra.mxu0 %v555
        %v851 = vpop.f32.mrf.mxu0
        %v852 = vadd.f32 %v763, %v851
        %v853 = vpop.f32.mrf.mxu0
        %v854 = vadd.f32 %v765, %v853
        %855 = vmatmul.bf16.gmra.mxu0 %v557
        %v856 = vpop.f32.mrf.mxu0
        %v857 = vadd.f32 %v768, %v856
        %v858 = vpop.f32.mrf.mxu0
        %v859 = vadd.f32 %v770, %v858
        %860 = vmatmul.bf16.gmra.mxu0 %v559
        %v861 = vpop.f32.mrf.mxu0
        %v862 = vadd.f32 %v773, %v861
        %v863 = vpop.f32.mrf.mxu0
        %v864 = vadd.f32 %v775, %v863
        %865 = vdwg.mxu0
        %v866 = vmax.f32 %v787, 0.0
        %v867 = vmax.f32 %v789, 0.0
        %v868 = vmax.f32 %v792, 0.0
        %v869 = vmax.f32 %v794, 0.0
        %v870 = vmax.f32 %v797, 0.0
        %v871 = vmax.f32 %v799, 0.0
        %v872 = vmax.f32 %v802, 0.0
        %v873 = vmax.f32 %v804, 0.0
        %v874 = vmax.f32 %v807, 0.0
        %v875 = vmax.f32 %v809, 0.0
        %v876 = vmax.f32 %v812, 0.0
        %v877 = vmax.f32 %v814, 0.0
        %v878 = vmax.f32 %v817, 0.0
        %v879 = vmax.f32 %v819, 0.0
        %v880 = vmax.f32 %v822, 0.0
        %v881 = vmax.f32 %v824, 0.0
        %v882 = vmax.f32 %v827, 0.0
        %v883 = vmax.f32 %v829, 0.0
        %v884 = vmax.f32 %v832, 0.0
        %v885 = vmax.f32 %v834, 0.0
        %v886 = vmax.f32 %v837, 0.0
        %v887 = vmax.f32 %v839, 0.0
        %v888 = vmax.f32 %v842, 0.0
        %v889 = vmax.f32 %v844, 0.0
        %v890 = vmax.f32 %v847, 0.0
        %v891 = vmax.f32 %v849, 0.0
        %v892 = vmax.f32 %v852, 0.0
        %v893 = vmax.f32 %v854, 0.0
        %v894 = vmax.f32 %v857, 0.0
        %v895 = vmax.f32 %v859, 0.0
        %v896 = vmax.f32 %v862, 0.0
        %v897 = vmax.f32 %v864, 0.0
        %v898 = vpack.c.bf16 %v867, %v866
        %v899 = vpack.c.bf16 %v869, %v868
        %v900 = vpack.c.bf16 %v871, %v870
        %v901 = vpack.c.bf16 %v873, %v872
        %v902 = vpack.c.bf16 %v875, %v874
        %v903 = vpack.c.bf16 %v877, %v876
        %v904 = vpack.c.bf16 %v879, %v878
        %v905 = vpack.c.bf16 %v881, %v880
        %v906 = vpack.c.bf16 %v883, %v882
        %v907 = vpack.c.bf16 %v885, %v884
        %v908 = vpack.c.bf16 %v887, %v886
        %v909 = vpack.c.bf16 %v889, %v888
        %v910 = vpack.c.bf16 %v891, %v890
        %v911 = vpack.c.bf16 %v893, %v892
        %v912 = vpack.c.bf16 %v895, %v894
        %v913 = vpack.c.bf16 %v897, %v896
        %v914 = vld [vmem:[#allocation8] sm:$0xf]
        %v915 = vld [vmem:[#allocation8 + $0x4] sm:$0xf]
        %v916 = vld [vmem:[#allocation8 + $0x8] sm:$0xf]
        %v917 = vld [vmem:[#allocation8 + $0xc] sm:$0xf]
        %v918 = vld [vmem:[#allocation8 + $0x10] sm:$0xf]
        %v919 = vld [vmem:[#allocation8 + $0x14] sm:$0xf]
        %v920 = vld [vmem:[#allocation8 + $0x18] sm:$0xf]
        %v921 = vld [vmem:[#allocation8 + $0x1c] sm:$0xf]
        %v922 = vld [vmem:[#allocation8 + $0x20] sm:$0xf]
        %v923 = vld [vmem:[#allocation8 + $0x24] sm:$0xf]
        %v924 = vld [vmem:[#allocation8 + $0x28] sm:$0xf]
        %v925 = vld [vmem:[#allocation8 + $0x2c] sm:$0xf]
        %v926 = vld [vmem:[#allocation8 + $0x30] sm:$0xf]
        %v927 = vld [vmem:[#allocation8 + $0x34] sm:$0xf]
        %v928 = vld [vmem:[#allocation8 + $0x38] sm:$0xf]
        %v929 = vld [vmem:[#allocation8 + $0x3c] sm:$0xf]
        %v946 = vunpack.c.l.b16 %v914
        %v947 = vunpack.c.l.b16 %v915
        %v948 = vunpack.c.l.b16 %v916
        %v949 = vunpack.c.l.b16 %v917
        %v950 = vunpack.c.l.b16 %v918
        %v951 = vunpack.c.l.b16 %v919
        %v952 = vunpack.c.l.b16 %v920
        %v953 = vunpack.c.l.b16 %v921
        %v954 = vunpack.c.l.b16 %v922
        %v955 = vunpack.c.l.b16 %v923
        %v956 = vunpack.c.l.b16 %v924
        %v957 = vunpack.c.l.b16 %v925
        %v958 = vunpack.c.l.b16 %v926
        %v959 = vunpack.c.l.b16 %v927
        %v960 = vunpack.c.l.b16 %v928
        %v961 = vunpack.c.l.b16 %v929
        %v962 = vpack.c.b16 %v947, %v946
        %v963 = vpack.c.b16 %v949, %v948
        %v964 = vpack.c.b16 %v951, %v950
        %v965 = vpack.c.b16 %v953, %v952
        %v966 = vpack.c.b16 %v955, %v954
        %v967 = vpack.c.b16 %v957, %v956
        %v968 = vpack.c.b16 %v959, %v958
        %v969 = vpack.c.b16 %v961, %v960
        %978 = vmatpush.bf16.msra.mxu0 %v969
        %979 = vmatpush.bf16.msra.mxu0 %v968
        %980 = vmatpush.bf16.msra.mxu0 %v967
        %981 = vmatpush.bf16.msra.mxu0 %v966
        %982 = vmatpush.bf16.msra.mxu0 %v965
        %983 = vmatpush.bf16.msra.mxu0 %v964
        %984 = vmatpush.bf16.msra.mxu0 %v963
        %985 = vmatpush.bf16.msra.mxu0 %v962
        %986 = vmatmul.bf16.gmra.mxu0 %v898
        %v987 = vpop.f32.mrf.mxu0
        %v988 = vadd.f32 0.0, %v987
        %v989 = vpop.f32.mrf.mxu0
        %v990 = vadd.f32 0.0, %v989
        %991 = vmatmul.bf16.gmra.mxu0 %v899
        %v992 = vpop.f32.mrf.mxu0
        %v993 = vadd.f32 0.0, %v992
        %v994 = vpop.f32.mrf.mxu0
        %v995 = vadd.f32 0.0, %v994
        %996 = vmatmul.bf16.gmra.mxu0 %v900
        %v997 = vpop.f32.mrf.mxu0
        %v998 = vadd.f32 0.0, %v997
        %v999 = vpop.f32.mrf.mxu0
        %v1000 = vadd.f32 0.0, %v999
        %1001 = vmatmul.bf16.gmra.mxu0 %v901
        %v1002 = vpop.f32.mrf.mxu0
        %v1003 = vadd.f32 0.0, %v1002
        %v1004 = vpop.f32.mrf.mxu0
        %v1005 = vadd.f32 0.0, %v1004
        %1006 = vmatmul.bf16.gmra.mxu0 %v902
        %v1007 = vpop.f32.mrf.mxu0
        %v1008 = vadd.f32 0.0, %v1007
        %v1009 = vpop.f32.mrf.mxu0
        %v1010 = vadd.f32 0.0, %v1009
        %1011 = vmatmul.bf16.gmra.mxu0 %v903
        %v1012 = vpop.f32.mrf.mxu0
        %v1013 = vadd.f32 0.0, %v1012
        %v1014 = vpop.f32.mrf.mxu0
        %v1015 = vadd.f32 0.0, %v1014
        %1016 = vmatmul.bf16.gmra.mxu0 %v904
        %v1017 = vpop.f32.mrf.mxu0
        %v1018 = vadd.f32 0.0, %v1017
        %v1019 = vpop.f32.mrf.mxu0
        %v1020 = vadd.f32 0.0, %v1019
        %1021 = vmatmul.bf16.gmra.mxu0 %v905
        %v1022 = vpop.f32.mrf.mxu0
        %v1023 = vadd.f32 0.0, %v1022
        %v1024 = vpop.f32.mrf.mxu0
        %v1025 = vadd.f32 0.0, %v1024
        %1026 = vmatmul.bf16.gmra.mxu0 %v906
        %v1027 = vpop.f32.mrf.mxu0
        %v1028 = vadd.f32 0.0, %v1027
        %v1029 = vpop.f32.mrf.mxu0
        %v1030 = vadd.f32 0.0, %v1029
        %1031 = vmatmul.bf16.gmra.mxu0 %v907
        %v1032 = vpop.f32.mrf.mxu0
        %v1033 = vadd.f32 0.0, %v1032
        %v1034 = vpop.f32.mrf.mxu0
        %v1035 = vadd.f32 0.0, %v1034
        %1036 = vmatmul.bf16.gmra.mxu0 %v908
        %v1037 = vpop.f32.mrf.mxu0
        %v1038 = vadd.f32 0.0, %v1037
        %v1039 = vpop.f32.mrf.mxu0
        %v1040 = vadd.f32 0.0, %v1039
        %1041 = vmatmul.bf16.gmra.mxu0 %v909
        %v1042 = vpop.f32.mrf.mxu0
        %v1043 = vadd.f32 0.0, %v1042
        %v1044 = vpop.f32.mrf.mxu0
        %v1045 = vadd.f32 0.0, %v1044
        %1046 = vmatmul.bf16.gmra.mxu0 %v910
        %v1047 = vpop.f32.mrf.mxu0
        %v1048 = vadd.f32 0.0, %v1047
        %v1049 = vpop.f32.mrf.mxu0
        %v1050 = vadd.f32 0.0, %v1049
        %1051 = vmatmul.bf16.gmra.mxu0 %v911
        %v1052 = vpop.f32.mrf.mxu0
        %v1053 = vadd.f32 0.0, %v1052
        %v1054 = vpop.f32.mrf.mxu0
        %v1055 = vadd.f32 0.0, %v1054
        %1056 = vmatmul.bf16.gmra.mxu0 %v912
        %v1057 = vpop.f32.mrf.mxu0
        %v1058 = vadd.f32 0.0, %v1057
        %v1059 = vpop.f32.mrf.mxu0
        %v1060 = vadd.f32 0.0, %v1059
        %1061 = vmatmul.bf16.gmra.mxu0 %v913
        %v1062 = vpop.f32.mrf.mxu0
        %v1063 = vadd.f32 0.0, %v1062
        %v1064 = vpop.f32.mrf.mxu0
        %v1065 = vadd.f32 0.0, %v1064
        %1066 = vdwg.mxu0
        %v1067 = vld [vmem:[%s301] sm:$0xff]
        %v1068 = vld [vmem:[%s301 + $0x8] sm:$0xff]
        %v1069 = vld [vmem:[%s301 + $0x10] sm:$0xff]
        %v1070 = vld [vmem:[%s301 + $0x18] sm:$0xff]
        %v1071 = vpack.c.bf16 %v990, %v988
        %v1072 = vpack.c.bf16 %v995, %v993
        %v1073 = vpack.c.bf16 %v1000, %v998
        %v1074 = vpack.c.bf16 %v1005, %v1003
        %v1075 = vpack.c.bf16 %v1010, %v1008
        %v1076 = vpack.c.bf16 %v1015, %v1013
        %v1077 = vpack.c.bf16 %v1020, %v1018
        %v1078 = vpack.c.bf16 %v1025, %v1023
        %v1079 = vpack.c.bf16 %v1030, %v1028
        %v1080 = vpack.c.bf16 %v1035, %v1033
        %v1081 = vpack.c.bf16 %v1040, %v1038
        %v1082 = vpack.c.bf16 %v1045, %v1043
        %v1083 = vpack.c.bf16 %v1050, %v1048
        %v1084 = vpack.c.bf16 %v1055, %v1053
        %v1085 = vpack.c.bf16 %v1060, %v1058
        %v1086 = vpack.c.bf16 %v1065, %v1063
        %v1087 = vperm.slane %v364, 0
        %v1092 = vunpack.c.l.b16 %v1067
        %v1093 = vunpack.c.h.b16 %v1067
        %v1094 = vunpack.c.l.b16 %v1068
        %v1095 = vunpack.c.h.b16 %v1068
        %v1096 = vunpack.c.l.b16 %v1069
        %v1097 = vunpack.c.h.b16 %v1069
        %v1098 = vunpack.c.l.b16 %v1070
        %v1099 = vunpack.c.h.b16 %v1070
        %v1100 = vpack.c.b16 %v1094, %v1092
        %v1101 = vpack.c.b16 %v1095, %v1093
        %v1102 = vpack.c.b16 %v1098, %v1096
        %v1103 = vpack.c.b16 %v1099, %v1097
        %1108 = vmatpush.bf16.msra.mxu0 %v1078
        %1109 = vmatpush.bf16.msra.mxu0 %v1077
        %1110 = vmatpush.bf16.msra.mxu0 %v1076
        %1111 = vmatpush.bf16.msra.mxu0 %v1075
        %1112 = vmatpush.bf16.msra.mxu0 %v1074
        %1113 = vmatpush.bf16.msra.mxu0 %v1073
        %1114 = vmatpush.bf16.msra.mxu0 %v1072
        %1115 = vmatpush.bf16.msra.mxu0 %v1071
        %1116 = vmatmul.bf16.gmra.mxu0 %v1100
        %v1117 = vpop.f32.mrf.mxu0
        %v1118 = vadd.f32 %v1087, %v1117
        %v1119 = vpop.f32.mrf.mxu0
        %v1120 = vadd.f32 %v1087, %v1119
        %1121 = vmatmul.bf16.gmra.mxu0 %v1102
        %v1122 = vpop.f32.mrf.mxu0
        %v1123 = vadd.f32 %v1087, %v1122
        %v1124 = vpop.f32.mrf.mxu0
        %v1125 = vadd.f32 %v1087, %v1124
        %1126 = vdwg.mxu0
        %1127 = vmatpush.bf16.msra.mxu0 %v1086
        %1128 = vmatpush.bf16.msra.mxu0 %v1085
        %1129 = vmatpush.bf16.msra.mxu0 %v1084
        %1130 = vmatpush.bf16.msra.mxu0 %v1083
        %1131 = vmatpush.bf16.msra.mxu0 %v1082
        %1132 = vmatpush.bf16.msra.mxu0 %v1081
        %1133 = vmatpush.bf16.msra.mxu0 %v1080
        %1134 = vmatpush.bf16.msra.mxu0 %v1079
        %1135 = vmatmul.bf16.gmra.mxu0 %v1101
        %v1136 = vpop.f32.mrf.mxu0
        %v1137 = vadd.f32 %v1118, %v1136
        %v1138 = vpop.f32.mrf.mxu0
        %v1139 = vadd.f32 %v1120, %v1138
        %1140 = vmatmul.bf16.gmra.mxu0 %v1103
        %v1141 = vpop.f32.mrf.mxu0
        %v1142 = vadd.f32 %v1123, %v1141
        %v1143 = vpop.f32.mrf.mxu0
        %v1144 = vadd.f32 %v1125, %v1143
        %1145 = vdwg.mxu0
        %v1146 = vsub.f32 %v1137, %v1142
        %v1147 = vsub.f32 %v1139, %v1144
        %v1148 = vand.u32 2147483647, %v1146
        %v1149 = vand.u32 2147483647, %v1147
        %v1150 = vperm.slane %v365, 0
        %v1151 = vmul.f32 %v1148, %v1150
        %v1152 = vmul.f32 %v1149, %v1150
        %1153 = vadd.xlane.f32.xlu0 %v1151
        %v1154 = vpop.xlane.xlu0 %1153
        %1155 = vadd.xlane.f32.xlu0 %v1152
        %v1156 = vpop.xlane.xlu0 %1155
        %v1157 = vperm.slane %v366, 0
        %v1158 = vadd.f32 %v1154, %v1157
        %v1159 = vadd.f32 %v1156, %v1157
        %1160 = vst [vmem:[%s358] sm:$0xff] %v1158
        %1161 = vst [vmem:[%s358 + $0x8] sm:$0xff] %v1159
        %s1162 = sand.u32 %s154, 1
        %s1163 = scalar_lea.sflag [#allocation4], %s1162
        %s1164 = sand.u32 %s154, 1
        %s1165 = smul.addr %s1164, 16
        %s1166 = scalar_lea.vmem [#allocation11], %s1165
        // Predicated region
        $region61: #{tpu_custom_call.1} parent=39 // pred_check
          %p1167 = pneg %p164
        $region62: #{tpu_custom_call.1} parent=39 // pred_check_branch
          %1169 = sbr.rel (%p1167) target = $region64
        $region63: #{tpu_custom_call.1} parent=39 // pred_region
          %s1170 = smul.u32 2, %s26
          %1172 = vsyncadd %s1163, 0
          %s1173 = smul.addr %s1170, 8
          %s1174 = scalar_lea.hbm %s5, %s1173
          %s1175 = sshll.u32 %s1166, 4
          %s1176 = int_to_ptr.vmem [resolvable:$true] %s1175
          %s1177 = sshll.u32 %s1174, 4
          %s1178 = int_to_ptr.hbm [resolvable:$true] %s1177
          %1183 = dma.vmem_to_hbm [thread:$0]  %s1176, 256, %s1178, %s1163, 128, 128, 8
        $region64: #{tpu_custom_call.1} parent=39 // pred_fallthru
          _
      $region40: #{tpu_custom_call.1} parent=5 // pred_fallthru
        _
      %p1184 = scmp.le.s32.totalorder 2, %s21
      // Predicated region
      $region65: #{tpu_custom_call.1} parent=5 // pred_check
        %p1185 = pneg %p1184
      $region66: #{tpu_custom_call.1} parent=5 // pred_check_branch
        %1187 = sbr.rel (%p1185) target = $region68
      $region67: #{tpu_custom_call.1} parent=5 // pred_region
        %s1188 = ssub.s32 %s21, 2
        // Predicated region
        $region69: #{tpu_custom_call.1} parent=67 // pred_check
          %p1189 = pneg %p170
        $region70: #{tpu_custom_call.1} parent=67 // pred_check_branch
          %1191 = sbr.rel (%p1189) target = $region72
        $region71: #{tpu_custom_call.1} parent=67 // pred_region
          %s1192 = sand.u32 %s155, 1
          %s1193 = scalar_lea.sflag [#allocation4], %s1192
          %s1194 = sand.u32 %s155, 1
          %s1195 = smul.addr %s1194, 16
          %s1196 = scalar_lea.vmem [#allocation11], %s1195
          %1198 = dma.done %s1193, 256
        $region72: #{tpu_custom_call.1} parent=67 // pred_fallthru
          _
      $region68: #{tpu_custom_call.1} parent=5 // pred_fallthru
        _
    $region6: #{tpu_custom_call.1} parent=1 // loop_footer
      %s25 = sadd.s32 1, %s21
    $region7: #{tpu_custom_call.1} parent=1 // loop_footer_branch
      %20 = sbr.rel target = $region3
    $region8: #{tpu_custom_call.1} parent=1 // loop_exit
      _
    %1199 = vsyncpa [#allocation3], 1
    %s1200 = scalar_lea.sflag [#allocation3], 1
    %1201 = vsyncpa %s1200, 1
    %1202 = vsyncpa [#allocation6], 1
    %s1203 = scalar_lea.sflag [#allocation6], 1
    %1204 = vsyncpa %s1203, 1
    %1205 = vsyncpa [#allocation9], 1
    %1206 = vsyncpa [#allocation4], 1
    %s1207 = scalar_lea.sflag [#allocation4], 1
    %1208 = vsyncpa %s1207, 1

</llo_original>
